<compile_context>
chip_gen: v6e
topology: v6e:2x2x1
jax: 0.10.0
libtpu: 0.0.40
codegen_flags: <defaults>
</compile_context>

<pallas_src>
import functools

import jax
import jax.numpy as jnp
from jax import lax
from jax.experimental import pallas as pl
from jax.experimental.pallas import tpu as pltpu


def _round_up(a, b):
    return -(-a // b) * b


def embed_kernel(idx_ref, tab_ref, exp_ref, out_ref, *, sub, n_sub):
    # idx_ref: (rows_tile, Pk) int32  token ids, P packed tokens per slab row
    #          (columns >= P are zero padding).
    # tab_ref: (K, W)  table, each row lane-tiled P times (tab[k, l] = T[k, l%D]).
    # exp_ref: (Pk, W) static 0/1 expansion matrix, E[p, l] = (l // D == p).
    # out_ref: (rows_tile, W) lane-dense output slab;
    #          out[r, l] = T[id of token r*P + l//D, l % D].
    K, W = tab_ref.shape
    tab = tab_ref[...]                       # (K, W), read once
    exp = exp_ref[...]                       # (Pk, W)

    # Hoist the K table-row broadcasts out of the sub-chunk loop (loop-invariant).
    rows_b = [jnp.broadcast_to(tab[k:k + 1, :], (sub, W)) for k in range(K)]

    def body(s, carry):
        r0 = pl.multiple_of(s * sub, sub)
        ids = idx_ref[pl.ds(r0, sub), :].astype(jnp.float32)          # (sub, Pk)
        # MXU id-lane expansion: exact for integer ids <= 256 (bf16-exact).
        id_lane = jnp.dot(ids, exp, preferred_element_type=jnp.float32)  # (sub, W)
        # K-way select chain (K-1 compares + K-1 selects), initialised from row 0.
        o = rows_b[0]
        for k in range(1, K):
            o = jnp.where(id_lane == jnp.float32(k), rows_b[k], o)
        out_ref[pl.ds(r0, sub), :] = o                                # dense store
        return carry

    lax.fori_loop(0, n_sub, body, 0, unroll=(n_sub <= 8))
    # TODO(synk): for large vocabularies (K >~ 10^3) replace the unrolled
    # select chain with a scalar-prefetch-driven row gather from HBM.


def embedder_forward(x, table, *, max_block_bytes=8 * 1024 * 1024, sub_rows=256):
    """x: (B, S) integer ids in [0, id_kind); table: (id_kind, d_model) f32."""
    B, S = x.shape
    K, D = table.shape
    N = B * S
    dtype = table.dtype
    itemsize = jnp.dtype(dtype).itemsize

    assert K <= 256, "MXU id-lane expansion is exact only for id_kind <= 256"

    # Pack P consecutive tokens per slab row so the output last dim is a
    # multiple of 128 lanes (dense vector stores / dense HBM writeback).
    if D % 128 == 0:
        P = 1
    elif 128 % D == 0:
        P = 128 // D
    else:
        P = 1  # TODO(synk): d_model not dividing 128 -> sub-128-lane block (masked stores)
    W = P * D
    Pk = max(P, 8)                      # pad id columns to a full sublane tile

    rows_needed = pl.cdiv(N, P)
    rows_padded = _round_up(rows_needed, 8)       # pad to 8 sublanes ONLY (not to tile)

    # Rows per grid step: ~max_block_bytes of OUTPUT per step (amortize the
    # ~0.35us per-step overhead), multiple of sub_rows.  VMEM budget per step
    # (double-buffered): 2*out + 2*lane-padded idx + ~1 MiB temps  ≈ 34 MiB at
    # 8 MiB output tiles — under the 48 MiB limit that is safe on v7x (64 MiB).
    rows_target = max(sub_rows, (max_block_bytes // (W * itemsize)) // sub_rows * sub_rows)
    if rows_padded <= rows_target:
        if rows_padded >= 2 * sub_rows:
            # Split into >=2 steps so both v7x TensorCores get work.
            rows_tile = _round_up(-(-rows_padded // 2), sub_rows)
        else:
            rows_tile = rows_padded
    else:
        rows_tile = rows_target

    sub = sub_rows if rows_tile % sub_rows == 0 else rows_tile
    n_sub = rows_tile // sub
    n_steps = pl.cdiv(rows_padded, rows_tile)

    # Token ids, padded with id 0; padding rows are clipped by Pallas / sliced off.
    idx = x.reshape(-1).astype(jnp.int32)
    idx = jnp.pad(idx, (0, rows_padded * P - N))
    idx2d = idx.reshape(rows_padded, P)
    if Pk > P:
        idx2d = jnp.pad(idx2d, ((0, 0), (0, Pk - P)))

    # Lane-tile the (tiny) table so row k already matches the packed output layout.
    tab_tiled = jnp.tile(table, (1, P)) if P > 1 else table          # (K, W)

    # Static 0/1 expansion matrix: E[p, l] = 1 iff lane l belongs to packed token p.
    lane_chunk = jnp.arange(W, dtype=jnp.int32)[None, :] // D        # (1, W)
    prow = jnp.arange(Pk, dtype=jnp.int32)[:, None]                  # (Pk, 1)
    expand = (lane_chunk == prow).astype(dtype)                      # (Pk, W)

    cost = pl.CostEstimate(
        flops=2 * rows_padded * W * Pk + 2 * rows_padded * W * (K - 1),
        transcendentals=0,
        bytes_accessed=itemsize * (rows_padded * W + K * W + Pk * W)
        + 4 * rows_padded * Pk,
    )

    out = pl.pallas_call(
        functools.partial(embed_kernel, sub=sub, n_sub=n_sub),
        out_shape=jax.ShapeDtypeStruct((rows_padded, W), dtype),
        grid=(n_steps,),
        in_specs=[
            pl.BlockSpec((rows_tile, Pk), lambda i: (i, 0)),   # token-id tile
            pl.BlockSpec((K, W), lambda i: (0, 0)),            # full table, resident
            pl.BlockSpec((Pk, W), lambda i: (0, 0)),           # expansion matrix
        ],
        out_specs=pl.BlockSpec((rows_tile, W), lambda i: (i, 0)),
        compiler_params=pltpu.CompilerParams(
            dimension_semantics=("parallel",),
            vmem_limit_bytes=48 * 1024 * 1024,
        ),
        cost_estimate=cost,
    )(idx2d, tab_tiled, expand)

    # (rows_padded, P*D) row-major == (rows_padded*P, D) row-major: free reshape.
    # The [:N] slice is a no-op (no copy) whenever N is a multiple of 8*P.
    return out.reshape(rows_padded * P, D)[:N].reshape(B, S, D)


if __name__ == "__main__":
    # Module config (small): id_kind=3 vocabulary, d_model=32 hidden.
    id_kind = 3
    d_model = 32
    B, S = 2, 8

    key = jax.random.PRNGKey(0)
    k_idx, k_tab = jax.random.split(key)

    # Deterministic parameter init (nn.Embedding default: N(0, 1)).
    table = jax.random.normal(k_tab, (id_kind, d_model), dtype=jnp.float32)
    # Integer id inputs.
    x = jax.random.randint(k_idx, (B, S), 0, id_kind, dtype=jnp.int32)

    out = embedder_forward(x, table)
    out = jax.block_until_ready(out)

    # Reference: plain JAX gather (== torch embed(x)).
    ref = jnp.take(table, x, axis=0)
    assert out.shape == (B, S, d_model)
    assert jnp.array_equal(out, ref), "mismatch vs reference gather"

    print("KERNEL_OK")
</pallas_src>

<mosaic_0001>
module attributes {stable_mosaic.version = 11 : i64} {
  func.func @embed_kernel(%arg0: i32, %arg1: memref<8x8xi32, #tpu.memory_space<vmem>>, %arg2: memref<3x128xf32, #tpu.memory_space<vmem>>, %arg3: memref<8x128xf32, #tpu.memory_space<vmem>>, %arg4: memref<8x128xf32, #tpu.memory_space<vmem>>) attributes {dimension_semantics = [#tpu.dimension_semantics<parallel>], iteration_bounds = array<i64: 1>, scalar_prefetch = 0 : i64, scratch_operands = 0 : i64, tpu.core_type = #tpu.core_type<tc>, window_params = [{transform_indices = @transform_0, window_bounds = array<i64: 8, 8>}, {pipeline_mode = #tpu.pipeline_mode<synchronous>, transform_indices = @transform_1, window_bounds = array<i64: 3, 128>}, {pipeline_mode = #tpu.pipeline_mode<synchronous>, transform_indices = @transform_2, window_bounds = array<i64: 8, 128>}, {transform_indices = @transform_3, window_bounds = array<i64: 8, 128>}]} {
    %c0 = arith.constant 0 : index
    %c0_0 = arith.constant 0 : index
    %0 = vector.load %arg2[%c0, %c0_0] : memref<3x128xf32, #tpu.memory_space<vmem>>, vector<3x128xf32>
    %c0_1 = arith.constant 0 : index
    %c0_2 = arith.constant 0 : index
    %1 = vector.load %arg3[%c0_1, %c0_2] : memref<8x128xf32, #tpu.memory_space<vmem>>, vector<8x128xf32>
    %2 = vector.extract_strided_slice %0 {offsets = [0, 0], sizes = [1, 128], strides = [1, 1]} : vector<3x128xf32> to vector<1x128xf32>
    %3 = vector.shape_cast %2 : vector<1x128xf32> to vector<1x128xf32>
    %4 = vector.broadcast %3 : vector<1x128xf32> to vector<8x128xf32>
    %5 = vector.extract_strided_slice %0 {offsets = [1, 0], sizes = [1, 128], strides = [1, 1]} : vector<3x128xf32> to vector<1x128xf32>
    %6 = vector.shape_cast %5 : vector<1x128xf32> to vector<1x128xf32>
    %7 = vector.broadcast %6 : vector<1x128xf32> to vector<8x128xf32>
    %8 = vector.extract_strided_slice %0 {offsets = [2, 0], sizes = [1, 128], strides = [1, 1]} : vector<3x128xf32> to vector<1x128xf32>
    %9 = vector.shape_cast %8 : vector<1x128xf32> to vector<1x128xf32>
    %10 = vector.broadcast %9 : vector<1x128xf32> to vector<8x128xf32>
    %c0_i32 = arith.constant 0 : i32
    %c8_i32 = arith.constant 8 : i32
    %11 = arith.muli %c0_i32, %c8_i32 : i32
    %12 = tpu.assume_multiple %11, 8 : i32
    %13 = arith.index_cast %12 : i32 to index
    %c0_3 = arith.constant 0 : index
    %14 = vector.load %arg1[%13, %c0_3] : memref<8x8xi32, #tpu.memory_space<vmem>>, vector<8x8xi32>
    %15 = arith.sitofp %14 : vector<8x8xi32> to vector<8x8xf32>
    %cst = arith.constant dense<0.000000e+00> : vector<8x128xf32>
    %16 = tpu.matmul %15, %1, %cst {dimension_numbers = #tpu.dot_dimension_numbers<[1], [0], [0], [1], [0, 0, 1, 1], [], []>} : vector<8x8xf32>, vector<8x128xf32>, vector<8x128xf32> -> vector<8x128xf32>
    %cst_4 = arith.constant 1.000000e+00 : f32
    %17 = vector.broadcast %cst_4 : f32 to vector<8x128xf32>
    %18 = arith.cmpf oeq, %16, %17 : vector<8x128xf32>
    %19 = arith.select %18, %7, %4 : vector<8x128xi1>, vector<8x128xf32>
    %cst_5 = arith.constant 2.000000e+00 : f32
    %20 = vector.broadcast %cst_5 : f32 to vector<8x128xf32>
    %21 = arith.cmpf oeq, %16, %20 : vector<8x128xf32>
    %22 = arith.select %21, %10, %19 : vector<8x128xi1>, vector<8x128xf32>
    %23 = arith.index_cast %12 : i32 to index
    %c0_6 = arith.constant 0 : index
    %24 = vector.load %arg4[%23, %c0_6] : memref<8x128xf32, #tpu.memory_space<vmem>>, vector<8x128xf32>
    tpu.vector_store %arg4[%23, %c0_6], %22 {strides = array<i32>} : memref<8x128xf32, #tpu.memory_space<vmem>>, vector<8x128xf32>,
    %c1_i32 = arith.constant 1 : i32
    return
  }
  func.func @transform_0(%arg0: i32) -> (i32, i32) {
    %c0_i32 = arith.constant 0 : i32
    %c0_i32_0 = arith.constant 0 : i32
    return %arg0, %c0_i32 : i32, i32
  }
  func.func @transform_1(%arg0: i32) -> (i32, i32) {
    %c0_i32 = arith.constant 0 : i32
    %c0_i32_0 = arith.constant 0 : i32
    %c0_i32_1 = arith.constant 0 : i32
    return %c0_i32, %c0_i32_0 : i32, i32
  }
  func.func @transform_2(%arg0: i32) -> (i32, i32) {
    %c0_i32 = arith.constant 0 : i32
    %c0_i32_0 = arith.constant 0 : i32
    %c0_i32_1 = arith.constant 0 : i32
    return %c0_i32, %c0_i32_0 : i32, i32
  }
  func.func @transform_3(%arg0: i32) -> (i32, i32) {
    %c0_i32 = arith.constant 0 : i32
    %c0_i32_0 = arith.constant 0 : i32
    return %arg0, %c0_i32 : i32, i32
  }
}

</mosaic_0001>

<llo_original>
// kernel: tpu_custom_call.1
$region0: #{tpu_custom_call.1}
  #allocation0 [shape = 'u32[]', space=smem, size = 0x4, offset = 0x4, fixed_abs, tag = 'smem constant byte address 0x4 - core index']
  #allocation1 [shape = 'u32[144,128]{1,0:T(1,128)}', space=vmem, size = 0x12000, scoped, tag = 'internal scratch']
  %s0 = inlined_call_operand.hbm [shape: s32[8,8], index: 0, kind: input, shape index: {}]
  %s1 = inlined_call_operand.hbm [shape: f32[3,128], index: 1, kind: input, shape index: {}]
  %s2 = inlined_call_operand.hbm [shape: f32[8,128], index: 2, kind: input, shape index: {}]
  %s3 = inlined_call_operand.hbm [shape: f32[8,128], index: 3, kind: output, shape index: {}]
  %s4 = sld [smem:[#allocation0]]
  $region34: #{tpu_custom_call.1} parent=0
    _
  %s6 = ssub.s32 1, %s4
  %s7 = scalar_select 0, %s6, %s4
  $region1: #{tpu_custom_call.1} parent=0
    #allocation2 [shape = 'u8[4096]{0}', space=vmem, size = 0x1000, scoped, tag = 'input window, operand 0, single buffered']
    #allocation3 [shape = 's32[1]{0}', space=sflag, size = 0x4, scoped, tag = 'scoped memory for tpu_custom_call.1']
    #allocation4 [shape = 's32[1]{0}', space=sflag, size = 0x4, scoped, tag = 'scoped memory for tpu_custom_call.1']
    #allocation5 [shape = 'u8[2048]{0}', space=vmem, size = 0x800, scoped, tag = 'input window, operand 1, single buffered']
    #allocation6 [shape = 's32[1]{0}', space=sflag, size = 0x4, scoped, tag = 'scoped memory for tpu_custom_call.1']
    #allocation7 [shape = 'u8[4096]{0}', space=vmem, size = 0x1000, scoped, tag = 'input window, operand 2, single buffered']
    #allocation8 [shape = 'u8[4096]{0}', space=vmem, size = 0x1000, scoped, tag = 'output window, operand 0, single buffered']
    %8 = vsyncpa [#allocation3], 0
    %9 = vsyncpa [#allocation6], 0
    %10 = vsyncpa [#allocation4], 0
    // Predicated region
    $region2: #{tpu_custom_call.1} parent=1 // pred_check
      _
    $region3: #{tpu_custom_call.1} parent=1 // pred_check_branch
      %12 = sbr.rel (0) target = $region5
    $region4: #{tpu_custom_call.1} parent=1 // pred_region
      %s14 = ssub.s32 128, 128
      %15 = vsyncadd [#allocation3], %s14
      %s17 = sshll.u32 [#allocation2], 4
      %s18 = int_to_ptr.vmem [resolvable:$true] %s17
      %20 = dma.hbm_to_vmem [thread:$0]  %s0, 128, %s18, [#allocation3]
    $region5: #{tpu_custom_call.1} parent=1 // pred_fallthru
      _
    // Predicated region
    $region6: #{tpu_custom_call.1} parent=1 // pred_check
      _
    $region7: #{tpu_custom_call.1} parent=1 // pred_check_branch
      %22 = sbr.rel (0) target = $region9
    $region8: #{tpu_custom_call.1} parent=1 // pred_region
      %s24 = ssub.s32 64, 64
      %25 = vsyncadd [#allocation6], %s24
      %s27 = sshll.u32 [#allocation5], 4
      %s28 = int_to_ptr.vmem [resolvable:$true] %s27
      %30 = dma.hbm_to_vmem [thread:$0]  %s1, 64, %s28, [#allocation6]
    $region9: #{tpu_custom_call.1} parent=1 // pred_fallthru
      _
    // Predicated region
    $region10: #{tpu_custom_call.1} parent=1 // pred_check
      _
    $region11: #{tpu_custom_call.1} parent=1 // pred_check_branch
      %32 = sbr.rel (0) target = $region13
    $region12: #{tpu_custom_call.1} parent=1 // pred_region
      %s34 = ssub.s32 128, 128
      %35 = vsyncadd [#allocation6], %s34
      %s37 = sshll.u32 [#allocation7], 4
      %s38 = int_to_ptr.vmem [resolvable:$true] %s37
      %40 = dma.hbm_to_vmem [thread:$0]  %s2, 128, %s38, [#allocation6]
    $region13: #{tpu_custom_call.1} parent=1 // pred_fallthru
      _
    // Predicated region
    $region14: #{tpu_custom_call.1} parent=1 // pred_check
      _
    $region15: #{tpu_custom_call.1} parent=1 // pred_check_branch
      %42 = sbr.rel (0) target = $region17
    $region16: #{tpu_custom_call.1} parent=1 // pred_region
      %43 = dma.done [#allocation3], 128
    $region17: #{tpu_custom_call.1} parent=1 // pred_fallthru
      _
    // Predicated region
    $region18: #{tpu_custom_call.1} parent=1 // pred_check
      _
    $region19: #{tpu_custom_call.1} parent=1 // pred_check_branch
      %45 = sbr.rel (0) target = $region21
    $region20: #{tpu_custom_call.1} parent=1 // pred_region
      %46 = dma.done [#allocation6], 64
    $region21: #{tpu_custom_call.1} parent=1 // pred_fallthru
      _
    // Predicated region
    $region22: #{tpu_custom_call.1} parent=1 // pred_check
      _
    $region23: #{tpu_custom_call.1} parent=1 // pred_check_branch
      %48 = sbr.rel (0) target = $region25
    $region24: #{tpu_custom_call.1} parent=1 // pred_region
      %49 = dma.done [#allocation6], 128
    $region25: #{tpu_custom_call.1} parent=1 // pred_fallthru
      _
    %v50 = vld [vmem:[#allocation5] sm:$0x7]
    %v51 = vld [vmem:[#allocation7] sm:$0xff]
    %v52 = vlaneseq
    %v53 = vshrl.u32 %v52, 7
    %v54 = vsub.s32 0, %v53
    %v55 = vrot.slane %v50, %v54
    %v56 = vlaneseq
    %v57 = vshrl.u32 %v56, 7
    %v58 = vsub.s32 1, %v57
    %v59 = vrot.slane %v50, %v58
    %v60 = vlaneseq
    %v61 = vshrl.u32 %v60, 7
    %v62 = vsub.s32 2, %v61
    %v63 = vrot.slane %v50, %v62
    %v64 = vld [vmem:[#allocation2] sm:$0xff]
    %v65 = vcvt.s32.f32 %v64
    %vm66 = vcmask 64512
    %v68 = vsel %vm66, %v65, 0
    %70 = vmatprep.subr.mxu0 0.0
    %71 = vmatpush1.msra.mxu0 0.0
    %72 = vmatprep.subr.mxu0 0.0
    %73 = vmatpush1.msra.mxu0 0.0
    %74 = vmatprep.subr.mxu0 0.0
    %75 = vmatpush1.msra.mxu0 0.0
    %76 = vmatprep.subr.mxu0 0.0
    %77 = vmatpush1.msra.mxu0 0.0
    %78 = vmatprep.subr.mxu0 0.0
    %79 = vmatpush1.msra.mxu0 0.0
    %80 = vmatprep.subr.mxu0 0.0
    %81 = vmatpush1.msra.mxu0 0.0
    %82 = vmatprep.subr.mxu0 0.0
    %83 = vmatpush1.msra.mxu0 0.0
    %84 = vmatprep.subr.mxu0 0.0
    %85 = vmatpush1.msra.mxu0 0.0
    %86 = vmatprep.subr.mxu0 0.0
    %87 = vmatpush1.msra.mxu0 0.0
    %88 = vmatprep.subr.mxu0 0.0
    %89 = vmatpush1.msra.mxu0 0.0
    %90 = vmatprep.subr.mxu0 0.0
    %91 = vmatpush1.msra.mxu0 0.0
    %92 = vmatprep.subr.mxu0 0.0
    %93 = vmatpush1.msra.mxu0 0.0
    %94 = vmatprep.subr.mxu0 0.0
    %95 = vmatpush1.msra.mxu0 0.0
    %96 = vmatprep.subr.mxu0 0.0
    %97 = vmatpush1.msra.mxu0 0.0
    %98 = vmatprep.subr.mxu0 0.0
    %99 = vmatpush1.msra.mxu0 0.0
    %100 = vmatprep.subr.mxu0 0.0
    %101 = vmatpush1.msra.mxu0 %v51
    %102 = vmatprep.subr.mxu0 0.0
    %103 = vmatpush2.msra.mxu0 0.0
    %104 = vmatprep.subr.mxu0 0.0
    %105 = vmatpush2.msra.mxu0 0.0
    %106 = vmatprep.subr.mxu0 0.0
    %107 = vmatpush2.msra.mxu0 0.0
    %108 = vmatprep.subr.mxu0 0.0
    %109 = vmatpush2.msra.mxu0 0.0
    %110 = vmatprep.subr.mxu0 0.0
    %111 = vmatpush2.msra.mxu0 0.0
    %112 = vmatprep.subr.mxu0 0.0
    %113 = vmatpush2.msra.mxu0 0.0
    %114 = vmatprep.subr.mxu0 0.0
    %115 = vmatpush2.msra.mxu0 0.0
    %116 = vmatprep.subr.mxu0 0.0
    %117 = vmatpush2.msra.mxu0 0.0
    %118 = vmatprep.subr.mxu0 0.0
    %119 = vmatpush2.msra.mxu0 0.0
    %120 = vmatprep.subr.mxu0 0.0
    %121 = vmatpush2.msra.mxu0 0.0
    %122 = vmatprep.subr.mxu0 0.0
    %123 = vmatpush2.msra.mxu0 0.0
    %124 = vmatprep.subr.mxu0 0.0
    %125 = vmatpush2.msra.mxu0 0.0
    %126 = vmatprep.subr.mxu0 0.0
    %127 = vmatpush2.msra.mxu0 0.0
    %128 = vmatprep.subr.mxu0 0.0
    %129 = vmatpush2.msra.mxu0 0.0
    %130 = vmatprep.subr.mxu0 0.0
    %131 = vmatpush2.msra.mxu0 0.0
    %132 = vmatprep.subr.mxu0 0.0
    %133 = vmatpush2.msra.mxu0 0.0
    %134 = vmatprep.mubr.f32.mxu0 0.0
    %135 = vmatmul.mubr.f32.gmra.mxu0 %v68
    %v136 = vpop.f32.mrf.mxu0
    %v137 = vadd.f32 0.0, %v136
    %v138 = vpop.f32.mrf.mxu0
    %139 = vdwg.mxu0
    %vm140 = vcmp.eq.f32.partialorder %v137, 1.0
    %v141 = vsel %vm140, %v59, %v55
    %vm142 = vcmp.eq.f32.partialorder %v137, 2.0
    %v143 = vsel %vm142, %v63, %v141
    %144 = vst [vmem:[#allocation8] sm:$0xff] %v143
    // Predicated region
    $region26: #{tpu_custom_call.1} parent=1 // pred_check
      _
    $region27: #{tpu_custom_call.1} parent=1 // pred_check_branch
      %146 = sbr.rel (0) target = $region29
    $region28: #{tpu_custom_call.1} parent=1 // pred_region
      %s148 = ssub.s32 128, 128
      %149 = vsyncadd [#allocation4], %s148
      %s151 = sshll.u32 [#allocation8], 4
      %s152 = int_to_ptr.vmem [resolvable:$true] %s151
      %154 = dma.vmem_to_hbm [thread:$0]  %s152, 128, %s3, [#allocation4]
    $region29: #{tpu_custom_call.1} parent=1 // pred_fallthru
      _
    // Predicated region
    $region30: #{tpu_custom_call.1} parent=1 // pred_check
      _
    $region31: #{tpu_custom_call.1} parent=1 // pred_check_branch
      %156 = sbr.rel (0) target = $region33
    $region32: #{tpu_custom_call.1} parent=1 // pred_region
      %157 = dma.done [#allocation4], 128
    $region33: #{tpu_custom_call.1} parent=1 // pred_fallthru
      _
    %158 = vsyncpa [#allocation3], 1
    %159 = vsyncpa [#allocation6], 1
    %160 = vsyncpa [#allocation4], 1

</llo_original>
